<compile_context>
chip_gen: v5e
topology: v5e:2x2
jax: 0.10.0
libtpu: 0.0.40
codegen_flags: <defaults>
</compile_context>

<pallas_src>
import jax
import jax.numpy as jnp
from jax.experimental import pallas as pl
from jax.experimental.pallas import tpu as pltpu

_LANE = 128
_SUBLANE = 8
_STEP_BYTES_TARGET = 2 << 20  # aim for >= ~2 MiB of x+out bytes per grid step


def _round_up(x, m):
    return ((x + m - 1) // m) * m


def _vmem_budget():
    """Per-generation live-buffer budget and vmem_limit ceiling."""
    try:
        cap = int(pltpu.get_tpu_info().vmem_capacity_bytes)
    except Exception:
        cap = 64 << 20  # conservative fallback: v7x per-TensorCore VMEM
    budget = max(cap // 2 - (4 << 20), 12 << 20)       # live working set
    limit_ceiling = max(cap - (8 << 20), 16 << 20)     # never claim all of VMEM
    return budget, limit_ceiling


def _plan(B, in_dims, out_dims, L, x_dtype, w_dtype):
    """Choose (TB, TL, vmem_limit_bytes)."""
    x_item = jnp.dtype(x_dtype).itemsize
    w_item = jnp.dtype(w_dtype).itemsize
    in_p = _round_up(in_dims, _SUBLANE)
    out_p = _round_up(out_dims, _SUBLANE)
    # Resident weight + bias blocks (lane/sublane padded, weight's own dtype),
    # counted twice: the pipeline double-buffers every BlockSpec input.
    w_bytes = (out_p * _round_up(in_dims, _LANE) + out_p * _LANE) * w_item
    budget, limit_ceiling = _vmem_budget()

    def live_bytes(tb, tl):
        tl_p = _round_up(tl, _LANE)
        xo = tb * (in_p + out_p) * tl_p * x_item      # one x block + one out block
        return 2 * xo + 2 * w_bytes                   # double-buffered

    # --- TL: cover all of L if it fits with TB=1 (fewer, bigger contiguous DMAs).
    tl = _round_up(L, _LANE)
    while tl > _LANE and live_bytes(1, tl) > budget:
        tl -= _LANE
    if tl >= L:
        tl = L                                        # single full-extent L tile
    n_l = pl.cdiv(L, tl)

    # --- TB: fold batches until a grid step moves ~_STEP_BYTES_TARGET (under
    #     VMEM), keeping >= 2 grid units when possible for megacore sharding.
    tb_cap = B
    if n_l == 1 and B >= 2:
        tb_cap = max(B // 2, 1)
    tb = 1
    for d in range(1, B + 1):
        if d > tb_cap:
            break
        if B % d:
            continue
        if live_bytes(d, tl) > budget:
            break
        tb = d
        if d * (in_p + out_p) * _round_up(tl, _LANE) * x_item >= _STEP_BYTES_TARGET:
            break

    live = live_bytes(tb, tl)
    vmem_limit = int(min(limit_ceiling, max(live + live // 2 + (2 << 20), 16 << 20)))
    return tb, tl, vmem_limit


def _linear_regressor_kernel(x_ref, w_ref, b_ref, o_ref):
    # x_ref: (TB, in_dims, TL)   w_ref: (out_dims, in_dims)
    # b_ref: (out_dims, 1)       o_ref: (TB, out_dims, TL)
    x = x_ref[...]
    w = w_ref[...]
    tb = x.shape[0]
    # Single batched contraction: W stays resident across the TB batches and the
    # result lands directly in (tb, out_dims, TL) layout (no in-kernel transpose).
    wb = jnp.broadcast_to(w, (tb,) + w.shape)
    y = jnp.einsum("boi,bil->bol", wb, x, preferred_element_type=jnp.float32)
    bb = b_ref[...].astype(jnp.float32)[None, :, :]   # hoisted bias broadcast
    o_ref[...] = (y + bb).astype(o_ref.dtype)


def linear_regressor(x, weight, bias):
    """y[b, o, l] = sum_i W[o, i] * x[b, i, l] + bias[o].

    x: (B, in_dims, L), weight: (out_dims, in_dims), bias: (out_dims,).
    dtype-generic; pass bf16 x / weight on v6e/v7x to halve HBM traffic
    (the MXU still accumulates in f32).
    """
    B, in_dims, L = x.shape
    out_dims = weight.shape[0]

    tb, tl, vmem_limit = _plan(B, in_dims, out_dims, L, x.dtype, weight.dtype)
    bias2d = bias.reshape(out_dims, 1)

    grid = (B // tb, pl.cdiv(L, tl))

    # TODO(synk): if an xprof trace shows exposed DMA gaps on v7x, add
    # pipeline_mode=pl.Buffered(3) on the x BlockSpec (gated on the VMEM budget).
    return pl.pallas_call(
        _linear_regressor_kernel,
        out_shape=jax.ShapeDtypeStruct((B, out_dims, L), x.dtype),
        grid_spec=pltpu.PrefetchScalarGridSpec(
            num_scalar_prefetch=0,
            grid=grid,
            in_specs=[
                pl.BlockSpec((tb, in_dims, tl), lambda b, l: (b, 0, l)),
                pl.BlockSpec((out_dims, in_dims), lambda b, l: (0, 0)),
                pl.BlockSpec((out_dims, 1), lambda b, l: (0, 0)),
            ],
            out_specs=pl.BlockSpec((tb, out_dims, tl), lambda b, l: (b, 0, l)),
        ),
        compiler_params=pltpu.CompilerParams(
            # Both grid axes are output-independent -> megacore sharding on v7x.
            dimension_semantics=("parallel", "parallel"),
            vmem_limit_bytes=vmem_limit,
        ),
    )(x, weight, bias2d)


if __name__ == "__main__":
    key = jax.random.PRNGKey(0)
    kx, kw, kb = jax.random.split(key, 3)

    def run_case(B, in_dims, out_dims, L, dtype, atol, rtol):
        x = jax.random.normal(kx, (B, in_dims, L), dtype=jnp.float32)
        # Mimic nn.Linear default init: U(-1/sqrt(in), 1/sqrt(in)).
        bound = 1.0 / (in_dims ** 0.5)
        w = jax.random.uniform(kw, (out_dims, in_dims), jnp.float32, -bound, bound)
        b = jax.random.uniform(kb, (out_dims,), jnp.float32, -bound, bound)

        xd, wd, bd = x.astype(dtype), w.astype(dtype), b.astype(dtype)
        y = jax.block_until_ready(linear_regressor(xd, wd, bd))

        # Pure-JAX reference of the PyTorch forward: (x.mT @ W^T + b).mT
        ref = (
            jnp.einsum("bil,oi->bol", xd.astype(jnp.float32), wd.astype(jnp.float32))
            + bd.astype(jnp.float32)[None, :, None]
        )
        assert y.shape == (B, out_dims, L)
        assert jnp.allclose(y.astype(jnp.float32), ref, atol=atol, rtol=rtol), (
            f"mismatch for config {(B, in_dims, out_dims, L, dtype)}"
        )

    # Main small config (matches the module's forward contract).
    run_case(2, 32, 8, 16, jnp.float32, 1e-5, 1e-5)
    # Exercises non-multiple-of-8 out_dims and non-multiple-of-128 L (no padding pass).
    run_case(3, 16, 4, 200, jnp.float32, 1e-5, 1e-5)
    # bf16 fast path (halves HBM traffic; MXU still accumulates in f32).
    run_case(2, 32, 8, 16, jnp.bfloat16, 5e-2, 5e-2)

    print("KERNEL_OK")
</pallas_src>

<mosaic_0001>
module attributes {stable_mosaic.version = 11 : i64} {
  func.func @_linear_regressor_kernel(%arg0: i32, %arg1: i32, %arg2: memref<1x32x16xf32, #tpu.memory_space<vmem>>, %arg3: memref<8x32xf32, #tpu.memory_space<vmem>>, %arg4: memref<8x1xf32, #tpu.memory_space<vmem>>, %arg5: memref<1x8x16xf32, #tpu.memory_space<vmem>>) attributes {dimension_semantics = [#tpu.dimension_semantics<parallel>, #tpu.dimension_semantics<parallel>], iteration_bounds = array<i64: 2, 1>, scalar_prefetch = 0 : i64, scratch_operands = 0 : i64, tpu.core_type = #tpu.core_type<tc>, window_params = [{transform_indices = @transform_0, window_bounds = array<i64: 1, 32, 16>}, {pipeline_mode = #tpu.pipeline_mode<synchronous>, transform_indices = @transform_1, window_bounds = array<i64: 8, 32>}, {pipeline_mode = #tpu.pipeline_mode<synchronous>, transform_indices = @transform_2, window_bounds = array<i64: 8, 1>}, {transform_indices = @transform_3, window_bounds = array<i64: 1, 8, 16>}]} {
    %c0 = arith.constant 0 : index
    %c0_0 = arith.constant 0 : index
    %c0_1 = arith.constant 0 : index
    %0 = vector.load %arg2[%c0, %c0_0, %c0_1] : memref<1x32x16xf32, #tpu.memory_space<vmem>>, vector<1x32x16xf32>
    %c0_2 = arith.constant 0 : index
    %c0_3 = arith.constant 0 : index
    %1 = vector.load %arg3[%c0_2, %c0_3] : memref<8x32xf32, #tpu.memory_space<vmem>>, vector<8x32xf32>
    %2 = vector.shape_cast %1 : vector<8x32xf32> to vector<1x8x32xf32>
    "tpu.trace_start"() <{level = 10 : i32, message = "boi,bil->bol"}> : () -> ()
    %cst = arith.constant dense<0.000000e+00> : vector<1x8x16xf32>
    %3 = tpu.matmul %2, %0, %cst {dimension_numbers = #tpu.dot_dimension_numbers<[2], [1], [1], [2], [0, 0, 0, 1, 1, 2], [0], [0]>} : vector<1x8x32xf32>, vector<1x32x16xf32>, vector<1x8x16xf32> -> vector<1x8x16xf32>
    "tpu.trace_stop"() : () -> ()
    %c0_4 = arith.constant 0 : index
    %c0_5 = arith.constant 0 : index
    %4 = vector.load %arg4[%c0_4, %c0_5] : memref<8x1xf32, #tpu.memory_space<vmem>>, vector<8x1xf32>
    %5 = vector.shape_cast %4 : vector<8x1xf32> to vector<1x8x1xf32>
    %6 = vector.broadcast %5 : vector<1x8x1xf32> to vector<1x8x16xf32>
    %7 = arith.addf %3, %6 : vector<1x8x16xf32>
    %c0_6 = arith.constant 0 : index
    %c0_7 = arith.constant 0 : index
    %c0_8 = arith.constant 0 : index
    %8 = vector.load %arg5[%c0_6, %c0_7, %c0_8] : memref<1x8x16xf32, #tpu.memory_space<vmem>>, vector<1x8x16xf32>
    tpu.vector_store %arg5[%c0_6, %c0_7, %c0_8], %7 {strides = array<i32>} : memref<1x8x16xf32, #tpu.memory_space<vmem>>, vector<1x8x16xf32>,
    return
  }
  func.func @transform_0(%arg0: i32, %arg1: i32) -> (i32, i32, i32) {
    %c0_i32 = arith.constant 0 : i32
    %c0_i32_0 = arith.constant 0 : i32
    return %arg0, %c0_i32, %arg1 : i32, i32, i32
  }
  func.func @transform_1(%arg0: i32, %arg1: i32) -> (i32, i32) {
    %c0_i32 = arith.constant 0 : i32
    %c0_i32_0 = arith.constant 0 : i32
    %c0_i32_1 = arith.constant 0 : i32
    return %c0_i32, %c0_i32_0 : i32, i32
  }
  func.func @transform_2(%arg0: i32, %arg1: i32) -> (i32, i32) {
    %c0_i32 = arith.constant 0 : i32
    %c0_i32_0 = arith.constant 0 : i32
    %c0_i32_1 = arith.constant 0 : i32
    return %c0_i32, %c0_i32_0 : i32, i32
  }
  func.func @transform_3(%arg0: i32, %arg1: i32) -> (i32, i32, i32) {
    %c0_i32 = arith.constant 0 : i32
    %c0_i32_0 = arith.constant 0 : i32
    return %arg0, %c0_i32, %arg1 : i32, i32, i32
  }
}

</mosaic_0001>

<llo_original>
// kernel: tpu_custom_call.1
$region0: #{tpu_custom_call.1}
  #allocation0 [shape = 'u32[]', space=smem, size = 0x4, offset = 0x4, fixed_abs, tag = 'smem constant byte address 0x4 - core index']
  #allocation1 [shape = 'u32[72,128]{1,0:T(1,128)}', space=vmem, size = 0x9000, scoped, tag = 'internal scratch']
  %s0 = inlined_call_operand.vmem [shape: f32[2,32,16], index: 0, kind: input, shape index: {}]
  %s1 = inlined_call_operand.vmem [shape: f32[8,32], index: 1, kind: input, shape index: {}]
  %s2 = inlined_call_operand.vmem [shape: f32[8,1], index: 2, kind: input, shape index: {}]
  %s3 = inlined_call_operand.hbm [shape: f32[2,8,16], index: 3, kind: output, shape index: {}]
  %s4 = sld [smem:[#allocation0]]
  $region45: #{tpu_custom_call.1} parent=0
    _
  %s6 = ssub.s32 1, %s4
  %s7 = scalar_select 0, %s6, %s4
  $region1: #{tpu_custom_call.1} parent=0
    #allocation2 [shape = 'u8[8192]{0}', space=vmem, size = 0x2000, scoped, tag = 'output window, operand 0']
    #allocation3 [shape = 's32[2]{0}', space=sflag, size = 0x8, scoped, tag = 'scoped memory for tpu_custom_call.1']
    %8 = vsyncpa [#allocation3], 0
    %s9 = scalar_lea.sflag [#allocation3], 1
    %10 = vsyncpa %s9, 0
    loop: start=0, step=1, limit=4
    $region2: #{tpu_custom_call.1} parent=1 // loop_pre_header
      _
    $region3: #{tpu_custom_call.1} parent=1 // loop_header
      %s12 = sphi 0, %s16
      %p13 = scmp.ge.s32.totalorder %s12, 4
      %s19 = sphi 0, %s31
      %s20 = sphi 0, %s27
      %s21 = sphi 0, %s19
      %s22 = sphi 0, %s20
      %s23 = sphi 0, %s21
      %s24 = sphi 0, %s22
      %s36 = sphi 0, %s38
      %s39 = sphi 0, %s36
      %s40 = sphi 0, %s39
      %s56 = sphi 0, %s40
      %s60 = sphi 0, %s60
      %s62 = sphi 0, %s60
      %s63 = sphi 0, %s62
      %s77 = sphi 0, %s63
      %s81 = sphi 0, %s81
      %s83 = sphi 0, %s81
      %s84 = sphi 0, %s83
      %s98 = sphi 0, %s84
      %s106 = sphi 0, %s108
      %s109 = sphi 0, %s106
      %s110 = sphi 0, %s109
      %s126 = sphi 0, %s110
    $region4: #{tpu_custom_call.1} parent=1 // loop_header_branch
      %15 = sbr.rel (%p13) target = $region8
    $region5: #{tpu_custom_call.1} parent=1 // loop_body
      %s17 = ssub.s32 %s12, 1
      %s18 = ssub.s32 %s12, 2
      %s25 = sadd.s32 1, %s20
      %p26 = scmp.ge.s32.totalorder %s25, 1
      %s27 = scalar_select %p26, 0, %s25
      %s28 = sadd.s32 1, %s19
      %s29 = scalar_select %p26, %s28, %s19
      %p30 = scmp.ge.s32.totalorder %s29, 2
      %s31 = scalar_select %p30, 0, %s29
      %s32 = ssub.s32 %s19, %s31
      %s33 = ssub.s32 %s20, %s27
      %s34 = sor.u32 %s32, %s33
      %p35 = scmp.eq.s32.totalorder %s34, 0
      %s37 = sadd.s32 %s36, 1
      %s38 = scalar_select %p35, %s36, %s37
      %p41 = pneg %p35
      %p42 = scmp.eq.s32.totalorder %s12, 1
      %p43 = por %p41, %p42
      %p44 = scmp.ne.s32.totalorder %s36, %s39
      %p45 = scmp.eq.s32.totalorder %s12, 0
      %p46 = por %p44, %p45
      %p47 = scmp.ne.s32.totalorder %s36, %s39
      %p48 = scmp.eq.s32.totalorder %s17, 1
      %p49 = por %p47, %p48
      %p50 = scmp.ne.s32.totalorder %s39, %s40
      %p51 = scmp.eq.s32.totalorder %s17, 0
      %p52 = por %p50, %p51
      %p53 = scmp.ne.s32.totalorder %s39, %s40
      %p54 = scmp.eq.s32.totalorder %s18, 1
      %p55 = por %p53, %p54
      %p57 = scmp.ne.s32.totalorder %s40, %s56
      %p58 = scmp.eq.s32.totalorder %s18, 0
      %p59 = por %p57, %p58
      %s61 = sadd.s32 %s60, 1
      %p64 = scmp.eq.s32.totalorder %s12, 1
      %p65 = scmp.ne.s32.totalorder %s60, %s62
      %p66 = scmp.eq.s32.totalorder %s12, 0
      %p67 = por %p65, %p66
      %p68 = scmp.ne.s32.totalorder %s60, %s62
      %p69 = scmp.eq.s32.totalorder %s17, 1
      %p70 = por %p68, %p69
      %p71 = scmp.ne.s32.totalorder %s62, %s63
      %p72 = scmp.eq.s32.totalorder %s17, 0
      %p73 = por %p71, %p72
      %p74 = scmp.ne.s32.totalorder %s62, %s63
      %p75 = scmp.eq.s32.totalorder %s18, 1
      %p76 = por %p74, %p75
      %p78 = scmp.ne.s32.totalorder %s63, %s77
      %p79 = scmp.eq.s32.totalorder %s18, 0
      %p80 = por %p78, %p79
      %s82 = sadd.s32 %s81, 1
      %p85 = scmp.eq.s32.totalorder %s12, 1
      %p86 = scmp.ne.s32.totalorder %s81, %s83
      %p87 = scmp.eq.s32.totalorder %s12, 0
      %p88 = por %p86, %p87
      %p89 = scmp.ne.s32.totalorder %s81, %s83
      %p90 = scmp.eq.s32.totalorder %s17, 1
      %p91 = por %p89, %p90
      %p92 = scmp.ne.s32.totalorder %s83, %s84
      %p93 = scmp.eq.s32.totalorder %s17, 0
      %p94 = por %p92, %p93
      %p95 = scmp.ne.s32.totalorder %s83, %s84
      %p96 = scmp.eq.s32.totalorder %s18, 1
      %p97 = por %p95, %p96
      %p99 = scmp.ne.s32.totalorder %s84, %s98
      %p100 = scmp.eq.s32.totalorder %s18, 0
      %p101 = por %p99, %p100
      %s102 = ssub.s32 %s19, %s31
      %s103 = ssub.s32 %s20, %s27
      %s104 = sor.u32 %s102, %s103
      %p105 = scmp.eq.s32.totalorder %s104, 0
      %s107 = sadd.s32 %s106, 1
      %s108 = scalar_select %p105, %s106, %s107
      %p111 = pneg %p105
      %p112 = scmp.eq.s32.totalorder %s12, 1
      %p113 = por %p111, %p112
      %p114 = scmp.ne.s32.totalorder %s106, %s109
      %p115 = scmp.eq.s32.totalorder %s12, 0
      %p116 = por %p114, %p115
      %p117 = scmp.ne.s32.totalorder %s106, %s109
      %p118 = scmp.eq.s32.totalorder %s17, 1
      %p119 = por %p117, %p118
      %p120 = scmp.ne.s32.totalorder %s109, %s110
      %p121 = scmp.eq.s32.totalorder %s17, 0
      %p122 = por %p120, %p121
      %p123 = scmp.ne.s32.totalorder %s109, %s110
      %p124 = scmp.eq.s32.totalorder %s18, 1
      %p125 = por %p123, %p124
      %p127 = scmp.ne.s32.totalorder %s110, %s126
      %p128 = scmp.eq.s32.totalorder %s18, 0
      %p129 = por %p127, %p128
      %p130 = scmp.le.s32.totalorder 1, %s12
      %p131 = scmp.lt.s32.totalorder %s12, 3
      %p132 = pnand %p130, %p131
      %p133 = pneg %p132
      // Predicated region
      $region9: #{tpu_custom_call.1} parent=5 // pred_check
        _
      $region10: #{tpu_custom_call.1} parent=5 // pred_check_branch
        %135 = sbr.rel (%p132) target = $region12
      $region11: #{tpu_custom_call.1} parent=5 // pred_region
        %s136 = ssub.s32 %s12, 1
        // Predicated region
        $region13: #{tpu_custom_call.1} parent=11 // pred_check
          %p137 = pneg %p73
        $region14: #{tpu_custom_call.1} parent=11 // pred_check_branch
          %139 = sbr.rel (%p137) target = $region16
        $region15: #{tpu_custom_call.1} parent=11 // pred_region
          _
        $region16: #{tpu_custom_call.1} parent=11 // pred_fallthru
          _
        // Predicated region
        $region17: #{tpu_custom_call.1} parent=11 // pred_check
          %p140 = pneg %p94
        $region18: #{tpu_custom_call.1} parent=11 // pred_check_branch
          %142 = sbr.rel (%p140) target = $region20
        $region19: #{tpu_custom_call.1} parent=11 // pred_region
          _
        $region20: #{tpu_custom_call.1} parent=11 // pred_fallthru
          _
      $region12: #{tpu_custom_call.1} parent=5 // pred_fallthru
        _
      %p143 = scmp.lt.s32.totalorder %s12, 2
      // Predicated region
      $region21: #{tpu_custom_call.1} parent=5 // pred_check
        %p144 = pneg %p143
      $region22: #{tpu_custom_call.1} parent=5 // pred_check_branch
        %146 = sbr.rel (%p144) target = $region24
      $region23: #{tpu_custom_call.1} parent=5 // pred_region
        // Predicated region
        $region25: #{tpu_custom_call.1} parent=23 // pred_check
          %p147 = pneg %p46
        $region26: #{tpu_custom_call.1} parent=23 // pred_check_branch
          %149 = sbr.rel (%p147) target = $region28
        $region27: #{tpu_custom_call.1} parent=23 // pred_region
          %p150 = scmp.lt.s32.totalorder %s19, 1
          %s151 = scalar_select %p150, %s19, 1
          %p152 = scmp.lt.s32.totalorder %s20, 0
          %s153 = scalar_select %p152, %s20, 0
          %s154 = smul.addr %s151, 4
          %s155 = sadd.s32 %s153, %s154
          %s156 = smul.addr %s155, 8
          %s157 = scalar_lea.vmem %s0, %s156
        $region28: #{tpu_custom_call.1} parent=23 // pred_fallthru
          _
      $region24: #{tpu_custom_call.1} parent=5 // pred_fallthru
        _
      %p158 = scmp.le.s32.totalorder 1, %s12
      %p159 = scmp.lt.s32.totalorder %s12, 3
      %p160 = pnand %p158, %p159
      %p161 = pneg %p160
      // Predicated region
      $region29: #{tpu_custom_call.1} parent=5 // pred_check
        _
      $region30: #{tpu_custom_call.1} parent=5 // pred_check_branch
        %163 = sbr.rel (%p160) target = $region32
      $region31: #{tpu_custom_call.1} parent=5 // pred_region
        %s164 = ssub.s32 %s12, 1
        %p165 = scmp.lt.s32.totalorder %s21, 1
        %s166 = scalar_select %p165, %s21, 1
        %p167 = scmp.lt.s32.totalorder %s22, 0
        %s168 = scalar_select %p167, %s22, 0
        %s169 = smul.addr %s166, 4
        %s170 = sadd.s32 %s168, %s169
        %s171 = smul.addr %s170, 8
        %s172 = scalar_lea.vmem %s0, %s171
        %p173 = pneg %p52
        %p174 = pneg %p49
        %p175 = pneg %p73
        %p176 = pneg %p70
        %p177 = pneg %p94
        %p178 = pneg %p91
        %p179 = pneg %p122
        %p180 = pneg %p119
        %s181 = sand.u32 %s109, 1
        %s182 = scalar_lea.sflag [#allocation3], %s181
        %s183 = sand.u32 %s109, 1
        %s184 = smul.addr %s183, 8
        %s185 = scalar_lea.vmem [#allocation2], %s184
        %p186 = scmp.lt.s32.totalorder %s21, 1
        %s187 = scalar_select %p186, %s21, 1
        %p188 = scmp.lt.s32.totalorder %s22, 0
        %s189 = scalar_select %p188, %s22, 0
        %s190 = smul.addr %s187, 4
        %s191 = sadd.s32 %s189, %s190
        %s192 = smul.addr %s191, 8
        %s193 = scalar_lea.vmem %s0, %s192
        %v194 = vld [vmem:[%s193] sm:$0xff]
        %v195 = vld [vmem:[%s193 + $0x8] sm:$0xff]
        %v196 = vld [vmem:[%s193 + $0x10] sm:$0xff]
        %v197 = vld [vmem:[%s193 + $0x18] sm:$0xff]
        %v198 = vld [vmem:[%s1] sm:$0xff]
        %v199 = vld [vmem:[%s2] sm:$0xff]
        %201 = vset.pattern.permute.xlu0 0
        %202 = vperm.xlu0 %201, %v199
        %v203 = vpop.permute.xlu0 %202
        %vm205 = vcmask 261120
        %v207 = vsel %vm205, %v198, 0
        %209 = vmatpush.msra.mxu0 0.0
        %210 = vmatpush.msra.mxu0 0.0
        %211 = vmatpush.msra.mxu0 0.0
        %212 = vmatpush.msra.mxu0 0.0
        %213 = vmatpush.msra.mxu0 0.0
        %214 = vmatpush.msra.mxu0 0.0
        %215 = vmatpush.msra.mxu0 0.0
        %216 = vmatpush.msra.mxu0 0.0
        %217 = vmatpush.msra.mxu0 0.0
        %218 = vmatpush.msra.mxu0 0.0
        %219 = vmatpush.msra.mxu0 0.0
        %220 = vmatpush.msra.mxu0 0.0
        %221 = vmatpush.msra.mxu0 %v197
        %222 = vmatpush.msra.mxu0 %v196
        %223 = vmatpush.msra.mxu0 %v195
        %224 = vmatpush.msra.mxu0 %v194
        %225 = vmatmul.f32.gmra.mxu0 %v207
        %v226 = vpop.f32.mrf.mxu0
        %v227 = vadd.f32 %v203, %v226
        %228 = vdwg.mxu0
        %vm229 = vcmask 130048
        %230 = vst.msk [vmem:[%s185] sm:$0xff] %vm229, %v227
        %s231 = sand.u32 %s109, 1
        %s232 = scalar_lea.sflag [#allocation3], %s231
        %s233 = sand.u32 %s109, 1
        %s234 = smul.addr %s233, 8
        %s235 = scalar_lea.vmem [#allocation2], %s234
        // Predicated region
        $region33: #{tpu_custom_call.1} parent=31 // pred_check
          %p236 = pneg %p119
        $region34: #{tpu_custom_call.1} parent=31 // pred_check_branch
          %238 = sbr.rel (%p236) target = $region36
        $region35: #{tpu_custom_call.1} parent=31 // pred_region
          %240 = vsyncadd %s232, 0
          %s241 = sadd.s32 %s22, %s21
          %s242 = smul.addr %s241, 8
          %s243 = scalar_lea.hbm %s3, %s242
          %s245 = sshll.u32 %s235, 4
          %s246 = int_to_ptr.vmem [resolvable:$true] %s245
          %s247 = sshll.u32 %s243, 4
          %s248 = int_to_ptr.hbm [resolvable:$true] %s247
          %250 = dma.vmem_to_hbm [thread:$0]  %s246, 128, %s248, %s232
        $region36: #{tpu_custom_call.1} parent=31 // pred_fallthru
          _
      $region32: #{tpu_custom_call.1} parent=5 // pred_fallthru
        _
      %p251 = scmp.le.s32.totalorder 2, %s12
      // Predicated region
      $region37: #{tpu_custom_call.1} parent=5 // pred_check
        %p252 = pneg %p251
      $region38: #{tpu_custom_call.1} parent=5 // pred_check_branch
        %254 = sbr.rel (%p252) target = $region40
      $region39: #{tpu_custom_call.1} parent=5 // pred_region
        %s255 = ssub.s32 %s12, 2
        // Predicated region
        $region41: #{tpu_custom_call.1} parent=39 // pred_check
          %p256 = pneg %p125
        $region42: #{tpu_custom_call.1} parent=39 // pred_check_branch
          %258 = sbr.rel (%p256) target = $region44
        $region43: #{tpu_custom_call.1} parent=39 // pred_region
          %s259 = sand.u32 %s110, 1
          %s260 = scalar_lea.sflag [#allocation3], %s259
          %s261 = sand.u32 %s110, 1
          %s262 = smul.addr %s261, 8
          %s263 = scalar_lea.vmem [#allocation2], %s262
          %265 = dma.done %s260, 128
        $region44: #{tpu_custom_call.1} parent=39 // pred_fallthru
          _
      $region40: #{tpu_custom_call.1} parent=5 // pred_fallthru
        _
    $region6: #{tpu_custom_call.1} parent=1 // loop_footer
      %s16 = sadd.s32 1, %s12
    $region7: #{tpu_custom_call.1} parent=1 // loop_footer_branch
      %11 = sbr.rel target = $region3
    $region8: #{tpu_custom_call.1} parent=1 // loop_exit
      _
    %266 = vsyncpa [#allocation3], 1
    %s267 = scalar_lea.sflag [#allocation3], 1
    %268 = vsyncpa %s267, 1

</llo_original>
